<compile_context>
chip_gen: v6e
topology: v6e:2x2x1
jax: 0.10.0
libtpu: 0.0.40
codegen_flags: <defaults>
</compile_context>

<pallas_src>
import functools

import jax
import jax.numpy as jnp
from jax import lax
from jax.experimental import pallas as pl
from jax.experimental.pallas import tpu as pltpu


def _resblock_kernel(x_ref, m1_ref, b1_ref, m2_ref, b2_ref, out_ref, halo_ref,
                     *, ksize, res_scale):
    """Fused ResBlock body for one batch element.

    x_ref:    (1, H, W*C)       lane-dense input tile (also the skip input)
    m*_ref:   (K*W*C, W*C)      block-banded folded conv weights
    b*_ref:   (1, W*C)          lane-replicated biases
    out_ref:  (1, H, W*C)
    halo_ref: (H + 2*pad, W*C)  VMEM scratch; rows [0, pad) and [H+pad, H+2pad)
                                are the zero height-padding halo
    """
    pad = ksize // 2
    H, WC = out_ref.shape[1], out_ref.shape[2]

    # Zero only the halo (border) rows -- never the whole buffer.
    halo_ref[0:pad, :] = jnp.zeros((pad, WC), jnp.float32)
    halo_ref[H + pad:H + 2 * pad, :] = jnp.zeros((pad, WC), jnp.float32)

    x2 = x_ref[0].astype(jnp.float32)                         # (H, WC)

    def conv(m_ref, b_ref):
        # im2col over the K height taps: K row-shifted (H, WC) views, concat'd
        # on the lane axis -> one (H, K*WC) x (K*WC, WC) MXU matmul.  Width
        # taps, width zero-padding and the channel contraction all live inside
        # the banded matrix.
        xcat = jnp.concatenate(
            [halo_ref[kh:kh + H, :] for kh in range(ksize)], axis=1)
        y = jnp.dot(xcat, m_ref[...], preferred_element_type=jnp.float32)
        return y + b_ref[...].astype(jnp.float32)             # (H, WC)

    # ---- conv1 + bias + ReLU ----
    halo_ref[pad:pad + H, :] = x2
    h1 = jnp.maximum(conv(m1_ref, b1_ref), 0.0)

    # ---- conv2 + bias (halo rows are still zero; reuse the scratch) ----
    halo_ref[pad:pad + H, :] = h1
    h2 = conv(m2_ref, b2_ref)

    # ---- residual scale + skip connection ----
    out_ref[0] = (h2 * res_scale + x2).astype(out_ref.dtype)


def _build_banded_weight(w, width):
    """Fold width taps + channel contraction of a KxK conv into a matrix.

    w: (K, K, Cin, Cout) HWIO.  Returns M of shape (K*width*Cin, width*Cout)
    with M[kh*W*C + j'*C + ci, j*C + co] = w[kh, j'-j+pad, ci, co] when the
    width tap is in range, else 0 (which also implements the width zero-pad).
    """
    K = w.shape[0]
    cin, cout = w.shape[2], w.shape[3]
    pad = K // 2
    jp = jnp.arange(width)[:, None]              # source column j'
    j = jnp.arange(width)[None, :]               # output column j
    kw_idx = jp - j + pad                        # (W, W)
    valid = (kw_idx >= 0) & (kw_idx < K)
    kw_clamped = jnp.clip(kw_idx, 0, K - 1)
    wg = w[:, kw_clamped, :, :]                  # (K, W, W, Cin, Cout)
    wg = jnp.where(valid[None, :, :, None, None], wg, 0.0)
    # -> (K, j', ci, j, co) -> (K*W*Cin, W*Cout)
    m = jnp.transpose(wg, (0, 1, 3, 2, 4)).reshape(K * width * cin,
                                                   width * cout)
    return m


def resblock_forward(x_nchw, w1, b1, w2, b2, *, res_scale=1.0):
    """ResBlock forward. x_nchw: (N, C, H, W); w: (K, K, Cin, Cout); b: (C,)."""
    N, C, H, W = x_nchw.shape
    K = w1.shape[0]
    pad = K // 2
    WC = W * C

    # NCHW -> NHWC -> lane-dense (N, H, W*C).  (Keep the surrounding model in
    # NHWC to drop these boundary transposes entirely.)
    x = jnp.transpose(x_nchw, (0, 2, 3, 1)).reshape(N, H, WC)

    m1 = _build_banded_weight(w1, W).astype(jnp.float32)       # (K*WC, WC)
    m2 = _build_banded_weight(w2, W).astype(jnp.float32)
    b1r = jnp.tile(b1, W).reshape(1, WC).astype(jnp.float32)   # (1, WC)
    b2r = jnp.tile(b2, W).reshape(1, WC).astype(jnp.float32)

    kernel = functools.partial(_resblock_kernel, ksize=K,
                               res_scale=float(res_scale))

    itemsize = jnp.dtype(x.dtype).itemsize
    cost = pl.CostEstimate(
        flops=2 * 2 * N * H * (K * WC) * WC,                   # two matmuls/img
        transcendentals=0,
        bytes_accessed=(2 * N * H * WC * itemsize              # x + out
                        + (m1.size + m2.size + b1r.size + b2r.size) * 4),
    )

    out = pl.pallas_call(
        kernel,
        out_shape=jax.ShapeDtypeStruct((N, H, WC), x.dtype),
        grid_spec=pltpu.PrefetchScalarGridSpec(
            num_scalar_prefetch=0,
            grid=(N,),
            in_specs=[
                pl.BlockSpec((1, H, WC), lambda n: (n, 0, 0)),
                # constant index_maps -> weights/biases fetched once, resident
                pl.BlockSpec((K * WC, WC), lambda n: (0, 0)),
                pl.BlockSpec((1, WC), lambda n: (0, 0)),
                pl.BlockSpec((K * WC, WC), lambda n: (0, 0)),
                pl.BlockSpec((1, WC), lambda n: (0, 0)),
            ],
            out_specs=pl.BlockSpec((1, H, WC), lambda n: (n, 0, 0)),
            scratch_shapes=[pltpu.VMEM((H + 2 * pad, WC), jnp.float32)],
        ),
        compiler_params=pltpu.CompilerParams(
            dimension_semantics=("parallel",)),
        cost_estimate=cost,
    )(x, m1, b1r, m2, b2r)

    return jnp.transpose(out.reshape(N, H, W, C), (0, 3, 1, 2))  # back to NCHW


def resblock_reference(x_nchw, w1, b1, w2, b2, *, res_scale=1.0):
    """Pure-JAX reference (matches PyTorch ResBlock with default_conv)."""
    x = jnp.transpose(x_nchw, (0, 2, 3, 1))
    dn = ('NHWC', 'HWIO', 'NHWC')
    y = lax.conv_general_dilated(x, w1, (1, 1), 'SAME', dimension_numbers=dn)
    y = jax.nn.relu(y + b1[None, None, None, :])
    y = lax.conv_general_dilated(y, w2, (1, 1), 'SAME', dimension_numbers=dn)
    y = (y + b2[None, None, None, :]) * res_scale + x
    return jnp.transpose(y, (0, 3, 1, 2))


if __name__ == "__main__":
    # Small config consistent with ResBlock(conv, n_feat, kernel_size);
    # W * C = 128 keeps the kernel lane-dense.
    N, C, H, W = 2, 8, 16, 16
    K = 3
    res_scale = 1.0

    key = jax.random.PRNGKey(0)
    kx, kw1, kb1, kw2, kb2 = jax.random.split(key, 5)

    fan_in = C * K * K
    scale = 1.0 / jnp.sqrt(fan_in)
    x = jax.random.normal(kx, (N, C, H, W), jnp.float32)
    w1 = jax.random.normal(kw1, (K, K, C, C), jnp.float32) * scale   # HWIO
    b1 = jax.random.normal(kb1, (C,), jnp.float32) * 0.1
    w2 = jax.random.normal(kw2, (K, K, C, C), jnp.float32) * scale
    b2 = jax.random.normal(kb2, (C,), jnp.float32) * 0.1

    out = resblock_forward(x, w1, b1, w2, b2, res_scale=res_scale)
    out = jax.block_until_ready(out)

    ref = resblock_reference(x, w1, b1, w2, b2, res_scale=res_scale)
    assert out.shape == (N, C, H, W)
    assert jnp.allclose(out, ref, atol=1e-4, rtol=1e-4), \
        f"max abs diff {jnp.max(jnp.abs(out - ref))}"

    print("KERNEL_OK")
</pallas_src>

<mosaic_0001>
module attributes {stable_mosaic.version = 11 : i64} {
  func.func @_resblock_kernel(%arg0: i32, %arg1: memref<1x16x128xf32, #tpu.memory_space<vmem>>, %arg2: memref<384x128xf32, #tpu.memory_space<vmem>>, %arg3: memref<1x128xf32, #tpu.memory_space<vmem>>, %arg4: memref<384x128xf32, #tpu.memory_space<vmem>>, %arg5: memref<1x128xf32, #tpu.memory_space<vmem>>, %arg6: memref<1x16x128xf32, #tpu.memory_space<vmem>>, %arg7: memref<18x128xf32, #tpu.memory_space<vmem>>) attributes {dimension_semantics = [#tpu.dimension_semantics<parallel>], iteration_bounds = array<i64: 2>, scalar_prefetch = 0 : i64, scratch_operands = 1 : i64, tpu.core_type = #tpu.core_type<tc>, window_params = [{transform_indices = @transform_0, window_bounds = array<i64: 1, 16, 128>}, {pipeline_mode = #tpu.pipeline_mode<synchronous>, transform_indices = @transform_1, window_bounds = array<i64: 384, 128>}, {pipeline_mode = #tpu.pipeline_mode<synchronous>, transform_indices = @transform_2, window_bounds = array<i64: 1, 128>}, {pipeline_mode = #tpu.pipeline_mode<synchronous>, transform_indices = @transform_3, window_bounds = array<i64: 384, 128>}, {pipeline_mode = #tpu.pipeline_mode<synchronous>, transform_indices = @transform_4, window_bounds = array<i64: 1, 128>}, {transform_indices = @transform_5, window_bounds = array<i64: 1, 16, 128>}]} {
    %cst = arith.constant 0.000000e+00 : f32
    %0 = vector.broadcast %cst : f32 to vector<1x128xf32>
    %c0 = arith.constant 0 : index
    %c0_0 = arith.constant 0 : index
    %1 = vector.load %arg7[%c0, %c0_0] : memref<18x128xf32, #tpu.memory_space<vmem>>, vector<1x128xf32>
    tpu.vector_store %arg7[%c0, %c0_0], %0 {strides = array<i32>} : memref<18x128xf32, #tpu.memory_space<vmem>>, vector<1x128xf32>,
    %cst_1 = arith.constant 0.000000e+00 : f32
    %2 = vector.broadcast %cst_1 : f32 to vector<1x128xf32>
    %c17 = arith.constant 17 : index
    %c0_2 = arith.constant 0 : index
    %3 = vector.load %arg7[%c17, %c0_2] : memref<18x128xf32, #tpu.memory_space<vmem>>, vector<1x128xf32>
    tpu.vector_store %arg7[%c17, %c0_2], %2 {strides = array<i32>} : memref<18x128xf32, #tpu.memory_space<vmem>>, vector<1x128xf32>,
    %c0_3 = arith.constant 0 : index
    %c0_4 = arith.constant 0 : index
    %c0_5 = arith.constant 0 : index
    %4 = vector.load %arg1[%c0_3, %c0_4, %c0_5] : memref<1x16x128xf32, #tpu.memory_space<vmem>>, vector<1x16x128xf32>
    %5 = vector.shape_cast %4 : vector<1x16x128xf32> to vector<16x128xf32>
    %c1 = arith.constant 1 : index
    %c0_6 = arith.constant 0 : index
    %6 = vector.load %arg7[%c1, %c0_6] : memref<18x128xf32, #tpu.memory_space<vmem>>, vector<16x128xf32>
    tpu.vector_store %arg7[%c1, %c0_6], %5 {strides = array<i32>} : memref<18x128xf32, #tpu.memory_space<vmem>>, vector<16x128xf32>,
    %c0_7 = arith.constant 0 : index
    %c0_8 = arith.constant 0 : index
    %7 = vector.load %arg7[%c0_7, %c0_8] : memref<18x128xf32, #tpu.memory_space<vmem>>, vector<16x128xf32>
    %c1_9 = arith.constant 1 : index
    %c0_10 = arith.constant 0 : index
    %8 = vector.load %arg7[%c1_9, %c0_10] : memref<18x128xf32, #tpu.memory_space<vmem>>, vector<16x128xf32>
    %c2 = arith.constant 2 : index
    %c0_11 = arith.constant 0 : index
    %9 = vector.load %arg7[%c2, %c0_11] : memref<18x128xf32, #tpu.memory_space<vmem>>, vector<16x128xf32>
    %10 = tpu.concatenate %7, %8, %9 in 1 : vector<16x128xf32>, vector<16x128xf32>, vector<16x128xf32> -> vector<16x384xf32>
    %c0_12 = arith.constant 0 : index
    %c0_13 = arith.constant 0 : index
    %11 = vector.load %arg2[%c0_12, %c0_13] : memref<384x128xf32, #tpu.memory_space<vmem>>, vector<384x128xf32>
    %cst_14 = arith.constant dense<0.000000e+00> : vector<16x128xf32>
    %12 = tpu.matmul %10, %11, %cst_14 {dimension_numbers = #tpu.dot_dimension_numbers<[1], [0], [0], [1], [0, 0, 1, 1], [], []>} : vector<16x384xf32>, vector<384x128xf32>, vector<16x128xf32> -> vector<16x128xf32>
    %c0_15 = arith.constant 0 : index
    %c0_16 = arith.constant 0 : index
    %13 = vector.load %arg3[%c0_15, %c0_16] : memref<1x128xf32, #tpu.memory_space<vmem>>, vector<1x128xf32>
    %14 = vector.broadcast %13 : vector<1x128xf32> to vector<16x128xf32>
    %15 = arith.addf %12, %14 : vector<16x128xf32>
    %cst_17 = arith.constant 0.000000e+00 : f32
    %16 = vector.broadcast %cst_17 : f32 to vector<16x128xf32>
    %17 = arith.maximumf %15, %16 : vector<16x128xf32>
    %c1_18 = arith.constant 1 : index
    %c0_19 = arith.constant 0 : index
    %18 = vector.load %arg7[%c1_18, %c0_19] : memref<18x128xf32, #tpu.memory_space<vmem>>, vector<16x128xf32>
    tpu.vector_store %arg7[%c1_18, %c0_19], %17 {strides = array<i32>} : memref<18x128xf32, #tpu.memory_space<vmem>>, vector<16x128xf32>,
    %c0_20 = arith.constant 0 : index
    %c0_21 = arith.constant 0 : index
    %19 = vector.load %arg7[%c0_20, %c0_21] : memref<18x128xf32, #tpu.memory_space<vmem>>, vector<16x128xf32>
    %c1_22 = arith.constant 1 : index
    %c0_23 = arith.constant 0 : index
    %20 = vector.load %arg7[%c1_22, %c0_23] : memref<18x128xf32, #tpu.memory_space<vmem>>, vector<16x128xf32>
    %c2_24 = arith.constant 2 : index
    %c0_25 = arith.constant 0 : index
    %21 = vector.load %arg7[%c2_24, %c0_25] : memref<18x128xf32, #tpu.memory_space<vmem>>, vector<16x128xf32>
    %22 = tpu.concatenate %19, %20, %21 in 1 : vector<16x128xf32>, vector<16x128xf32>, vector<16x128xf32> -> vector<16x384xf32>
    %c0_26 = arith.constant 0 : index
    %c0_27 = arith.constant 0 : index
    %23 = vector.load %arg4[%c0_26, %c0_27] : memref<384x128xf32, #tpu.memory_space<vmem>>, vector<384x128xf32>
    %cst_28 = arith.constant dense<0.000000e+00> : vector<16x128xf32>
    %24 = tpu.matmul %22, %23, %cst_28 {dimension_numbers = #tpu.dot_dimension_numbers<[1], [0], [0], [1], [0, 0, 1, 1], [], []>} : vector<16x384xf32>, vector<384x128xf32>, vector<16x128xf32> -> vector<16x128xf32>
    %c0_29 = arith.constant 0 : index
    %c0_30 = arith.constant 0 : index
    %25 = vector.load %arg5[%c0_29, %c0_30] : memref<1x128xf32, #tpu.memory_space<vmem>>, vector<1x128xf32>
    %26 = vector.broadcast %25 : vector<1x128xf32> to vector<16x128xf32>
    %27 = arith.addf %24, %26 : vector<16x128xf32>
    %cst_31 = arith.constant 1.000000e+00 : f32
    %28 = vector.broadcast %cst_31 : f32 to vector<16x128xf32>
    %29 = arith.mulf %27, %28 : vector<16x128xf32>
    %30 = arith.addf %29, %5 : vector<16x128xf32>
    %c0_32 = arith.constant 0 : index
    %c0_33 = arith.constant 0 : index
    %c0_34 = arith.constant 0 : index
    %31 = vector.load %arg6[%c0_32, %c0_33, %c0_34] : memref<1x16x128xf32, #tpu.memory_space<vmem>>, vector<1x16x128xf32>
    %32 = vector.shape_cast %31 : vector<1x16x128xf32> to vector<16x128xf32>
    %33 = vector.shape_cast %30 : vector<16x128xf32> to vector<1x16x128xf32>
    tpu.vector_store %arg6[%c0_32, %c0_33, %c0_34], %33 {strides = array<i32>} : memref<1x16x128xf32, #tpu.memory_space<vmem>>, vector<1x16x128xf32>,
    return
  }
  func.func @transform_0(%arg0: i32) -> (i32, i32, i32) {
    %c0_i32 = arith.constant 0 : i32
    %c0_i32_0 = arith.constant 0 : i32
    %c0_i32_1 = arith.constant 0 : i32
    return %arg0, %c0_i32, %c0_i32_0 : i32, i32, i32
  }
  func.func @transform_1(%arg0: i32) -> (i32, i32) {
    %c0_i32 = arith.constant 0 : i32
    %c0_i32_0 = arith.constant 0 : i32
    %c0_i32_1 = arith.constant 0 : i32
    return %c0_i32, %c0_i32_0 : i32, i32
  }
  func.func @transform_2(%arg0: i32) -> (i32, i32) {
    %c0_i32 = arith.constant 0 : i32
    %c0_i32_0 = arith.constant 0 : i32
    %c0_i32_1 = arith.constant 0 : i32
    return %c0_i32, %c0_i32_0 : i32, i32
  }
  func.func @transform_3(%arg0: i32) -> (i32, i32) {
    %c0_i32 = arith.constant 0 : i32
    %c0_i32_0 = arith.constant 0 : i32
    %c0_i32_1 = arith.constant 0 : i32
    return %c0_i32, %c0_i32_0 : i32, i32
  }
  func.func @transform_4(%arg0: i32) -> (i32, i32) {
    %c0_i32 = arith.constant 0 : i32
    %c0_i32_0 = arith.constant 0 : i32
    %c0_i32_1 = arith.constant 0 : i32
    return %c0_i32, %c0_i32_0 : i32, i32
  }
  func.func @transform_5(%arg0: i32) -> (i32, i32, i32) {
    %c0_i32 = arith.constant 0 : i32
    %c0_i32_0 = arith.constant 0 : i32
    %c0_i32_1 = arith.constant 0 : i32
    return %arg0, %c0_i32, %c0_i32_0 : i32, i32, i32
  }
}

</mosaic_0001>

<llo_original>
// kernel: tpu_custom_call.1
$region0: #{tpu_custom_call.1}
  #allocation0 [shape = 'u32[]', space=smem, size = 0x4, offset = 0x4, fixed_abs, tag = 'smem constant byte address 0x4 - core index']
  #allocation1 [shape = 'u32[144,128]{1,0:T(1,128)}', space=vmem, size = 0x12000, scoped, tag = 'internal scratch']
  #allocation2 [shape = 'f32[18,128]{1,0:T(8,128)}', space=vmem, size = 0x3000, scoped, tag = 'scratch operand']
  %s0 = inlined_call_operand.hbm [shape: f32[2,16,128], index: 0, kind: input, shape index: {}]
  %s1 = inlined_call_operand.hbm [shape: f32[384,128], index: 1, kind: input, shape index: {}]
  %s2 = inlined_call_operand.vmem [shape: f32[1,128], index: 2, kind: input, shape index: {}]
  %s3 = inlined_call_operand.hbm [shape: f32[384,128], index: 3, kind: input, shape index: {}]
  %s4 = inlined_call_operand.vmem [shape: f32[1,128], index: 4, kind: input, shape index: {}]
  %s5 = inlined_call_operand.hbm [shape: f32[2,16,128], index: 5, kind: output, shape index: {}]
  %s6 = sld [smem:[#allocation0]]
  $region65: #{tpu_custom_call.1} parent=0
    _
  %s8 = ssub.s32 1, %s6
  %s9 = scalar_select 0, %s8, %s6
  $region1: #{tpu_custom_call.1} parent=0
    #allocation3 [shape = 'u8[16384]{0}', space=vmem, size = 0x4000, scoped, tag = 'input window, operand 0']
    #allocation4 [shape = 's32[2]{0}', space=sflag, size = 0x8, scoped, tag = 'scoped memory for tpu_custom_call.1']
    #allocation5 [shape = 's32[2]{0}', space=sflag, size = 0x8, scoped, tag = 'scoped memory for tpu_custom_call.1']
    #allocation6 [shape = 'u8[196608]{0}', space=vmem, size = 0x30000, scoped, tag = 'input window, operand 1, single buffered']
    #allocation7 [shape = 's32[1]{0}', space=sflag, size = 0x4, scoped, tag = 'scoped memory for tpu_custom_call.1']
    #allocation8 [shape = 'u8[196608]{0}', space=vmem, size = 0x30000, scoped, tag = 'input window, operand 3, single buffered']
    #allocation9 [shape = 'u8[16384]{0}', space=vmem, size = 0x4000, scoped, tag = 'output window, operand 0']
    %10 = vsyncpa [#allocation4], 0
    %s11 = scalar_lea.sflag [#allocation4], 1
    %12 = vsyncpa %s11, 0
    %13 = vsyncpa [#allocation7], 0
    %14 = vsyncpa [#allocation5], 0
    %s15 = scalar_lea.sflag [#allocation5], 1
    %16 = vsyncpa %s15, 0
    loop: start=0, step=1, limit=4
    $region2: #{tpu_custom_call.1} parent=1 // loop_pre_header
      _
    $region3: #{tpu_custom_call.1} parent=1 // loop_header
      %s18 = sphi 0, %s22
      %p19 = scmp.ge.s32.totalorder %s18, 4
      %s28 = sphi 0, %s30
      %s31 = sphi 0, %s28
      %s32 = sphi 0, %s31
      %s48 = sphi 0, %s32
      %s52 = sphi 0, %s52
      %s54 = sphi 0, %s52
      %s55 = sphi 0, %s54
      %s69 = sphi 0, %s55
      %s73 = sphi 0, %s73
      %s75 = sphi 0, %s73
      %s76 = sphi 0, %s75
      %s90 = sphi 0, %s76
      %s94 = sphi 0, %s94
      %s96 = sphi 0, %s94
      %s97 = sphi 0, %s96
      %s111 = sphi 0, %s97
      %s115 = sphi 0, %s115
      %s117 = sphi 0, %s115
      %s118 = sphi 0, %s117
      %s132 = sphi 0, %s118
      %s138 = sphi 0, %s140
      %s141 = sphi 0, %s138
      %s142 = sphi 0, %s141
      %s158 = sphi 0, %s142
    $region4: #{tpu_custom_call.1} parent=1 // loop_header_branch
      %21 = sbr.rel (%p19) target = $region8
    $region5: #{tpu_custom_call.1} parent=1 // loop_body
      %s23 = ssub.s32 %s18, 1
      %s24 = ssub.s32 %s18, 2
      %s25 = sadd.s32 %s18, 1
      %s26 = ssub.s32 %s18, %s25
      %p27 = scmp.eq.s32.totalorder %s26, 0
      %s29 = sadd.s32 %s28, 1
      %s30 = scalar_select %p27, %s28, %s29
      %p33 = pneg %p27
      %p34 = scmp.eq.s32.totalorder %s18, 1
      %p35 = por %p33, %p34
      %p36 = scmp.ne.s32.totalorder %s28, %s31
      %p37 = scmp.eq.s32.totalorder %s18, 0
      %p38 = por %p36, %p37
      %p39 = scmp.ne.s32.totalorder %s28, %s31
      %p40 = scmp.eq.s32.totalorder %s23, 1
      %p41 = por %p39, %p40
      %p42 = scmp.ne.s32.totalorder %s31, %s32
      %p43 = scmp.eq.s32.totalorder %s23, 0
      %p44 = por %p42, %p43
      %p45 = scmp.ne.s32.totalorder %s31, %s32
      %p46 = scmp.eq.s32.totalorder %s24, 1
      %p47 = por %p45, %p46
      %p49 = scmp.ne.s32.totalorder %s32, %s48
      %p50 = scmp.eq.s32.totalorder %s24, 0
      %p51 = por %p49, %p50
      %s53 = sadd.s32 %s52, 1
      %p56 = scmp.eq.s32.totalorder %s18, 1
      %p57 = scmp.ne.s32.totalorder %s52, %s54
      %p58 = scmp.eq.s32.totalorder %s18, 0
      %p59 = por %p57, %p58
      %p60 = scmp.ne.s32.totalorder %s52, %s54
      %p61 = scmp.eq.s32.totalorder %s23, 1
      %p62 = por %p60, %p61
      %p63 = scmp.ne.s32.totalorder %s54, %s55
      %p64 = scmp.eq.s32.totalorder %s23, 0
      %p65 = por %p63, %p64
      %p66 = scmp.ne.s32.totalorder %s54, %s55
      %p67 = scmp.eq.s32.totalorder %s24, 1
      %p68 = por %p66, %p67
      %p70 = scmp.ne.s32.totalorder %s55, %s69
      %p71 = scmp.eq.s32.totalorder %s24, 0
      %p72 = por %p70, %p71
      %s74 = sadd.s32 %s73, 1
      %p77 = scmp.eq.s32.totalorder %s18, 1
      %p78 = scmp.ne.s32.totalorder %s73, %s75
      %p79 = scmp.eq.s32.totalorder %s18, 0
      %p80 = por %p78, %p79
      %p81 = scmp.ne.s32.totalorder %s73, %s75
      %p82 = scmp.eq.s32.totalorder %s23, 1
      %p83 = por %p81, %p82
      %p84 = scmp.ne.s32.totalorder %s75, %s76
      %p85 = scmp.eq.s32.totalorder %s23, 0
      %p86 = por %p84, %p85
      %p87 = scmp.ne.s32.totalorder %s75, %s76
      %p88 = scmp.eq.s32.totalorder %s24, 1
      %p89 = por %p87, %p88
      %p91 = scmp.ne.s32.totalorder %s76, %s90
      %p92 = scmp.eq.s32.totalorder %s24, 0
      %p93 = por %p91, %p92
      %s95 = sadd.s32 %s94, 1
      %p98 = scmp.eq.s32.totalorder %s18, 1
      %p99 = scmp.ne.s32.totalorder %s94, %s96
      %p100 = scmp.eq.s32.totalorder %s18, 0
      %p101 = por %p99, %p100
      %p102 = scmp.ne.s32.totalorder %s94, %s96
      %p103 = scmp.eq.s32.totalorder %s23, 1
      %p104 = por %p102, %p103
      %p105 = scmp.ne.s32.totalorder %s96, %s97
      %p106 = scmp.eq.s32.totalorder %s23, 0
      %p107 = por %p105, %p106
      %p108 = scmp.ne.s32.totalorder %s96, %s97
      %p109 = scmp.eq.s32.totalorder %s24, 1
      %p110 = por %p108, %p109
      %p112 = scmp.ne.s32.totalorder %s97, %s111
      %p113 = scmp.eq.s32.totalorder %s24, 0
      %p114 = por %p112, %p113
      %s116 = sadd.s32 %s115, 1
      %p119 = scmp.eq.s32.totalorder %s18, 1
      %p120 = scmp.ne.s32.totalorder %s115, %s117
      %p121 = scmp.eq.s32.totalorder %s18, 0
      %p122 = por %p120, %p121
      %p123 = scmp.ne.s32.totalorder %s115, %s117
      %p124 = scmp.eq.s32.totalorder %s23, 1
      %p125 = por %p123, %p124
      %p126 = scmp.ne.s32.totalorder %s117, %s118
      %p127 = scmp.eq.s32.totalorder %s23, 0
      %p128 = por %p126, %p127
      %p129 = scmp.ne.s32.totalorder %s117, %s118
      %p130 = scmp.eq.s32.totalorder %s24, 1
      %p131 = por %p129, %p130
      %p133 = scmp.ne.s32.totalorder %s118, %s132
      %p134 = scmp.eq.s32.totalorder %s24, 0
      %p135 = por %p133, %p134
      %s136 = ssub.s32 %s18, %s25
      %p137 = scmp.eq.s32.totalorder %s136, 0
      %s139 = sadd.s32 %s138, 1
      %s140 = scalar_select %p137, %s138, %s139
      %p143 = pneg %p137
      %p144 = scmp.eq.s32.totalorder %s18, 1
      %p145 = por %p143, %p144
      %p146 = scmp.ne.s32.totalorder %s138, %s141
      %p147 = scmp.eq.s32.totalorder %s18, 0
      %p148 = por %p146, %p147
      %p149 = scmp.ne.s32.totalorder %s138, %s141
      %p150 = scmp.eq.s32.totalorder %s23, 1
      %p151 = por %p149, %p150
      %p152 = scmp.ne.s32.totalorder %s141, %s142
      %p153 = scmp.eq.s32.totalorder %s23, 0
      %p154 = por %p152, %p153
      %p155 = scmp.ne.s32.totalorder %s141, %s142
      %p156 = scmp.eq.s32.totalorder %s24, 1
      %p157 = por %p155, %p156
      %p159 = scmp.ne.s32.totalorder %s142, %s158
      %p160 = scmp.eq.s32.totalorder %s24, 0
      %p161 = por %p159, %p160
      %p162 = scmp.le.s32.totalorder 1, %s18
      %p163 = scmp.lt.s32.totalorder %s18, 3
      %p164 = pnand %p162, %p163
      %p165 = pneg %p164
      // Predicated region
      $region9: #{tpu_custom_call.1} parent=5 // pred_check
        _
      $region10: #{tpu_custom_call.1} parent=5 // pred_check_branch
        %167 = sbr.rel (%p164) target = $region12
      $region11: #{tpu_custom_call.1} parent=5 // pred_region
        %s168 = ssub.s32 %s18, 1
        // Predicated region
        $region13: #{tpu_custom_call.1} parent=11 // pred_check
          %p169 = pneg %p65
        $region14: #{tpu_custom_call.1} parent=11 // pred_check_branch
          %171 = sbr.rel (%p169) target = $region16
        $region15: #{tpu_custom_call.1} parent=11 // pred_region
          %s173 = ssub.s32 6144, 6144
          %174 = vsyncadd [#allocation7], %s173
          %s175 = sshll.u32 [#allocation6], 4
          %s176 = int_to_ptr.vmem [resolvable:$true] %s175
          %181 = dma.hbm_to_vmem [thread:$0]  %s1, 6144, %s176, [#allocation7], 128, 128, 8
        $region16: #{tpu_custom_call.1} parent=11 // pred_fallthru
          _
        // Predicated region
        $region17: #{tpu_custom_call.1} parent=11 // pred_check
          %p182 = pneg %p86
        $region18: #{tpu_custom_call.1} parent=11 // pred_check_branch
          %184 = sbr.rel (%p182) target = $region20
        $region19: #{tpu_custom_call.1} parent=11 // pred_region
          _
        $region20: #{tpu_custom_call.1} parent=11 // pred_fallthru
          _
        // Predicated region
        $region21: #{tpu_custom_call.1} parent=11 // pred_check
          %p185 = pneg %p107
        $region22: #{tpu_custom_call.1} parent=11 // pred_check_branch
          %187 = sbr.rel (%p185) target = $region24
        $region23: #{tpu_custom_call.1} parent=11 // pred_region
          %s189 = ssub.s32 6144, 6144
          %190 = vsyncadd [#allocation7], %s189
          %s191 = sshll.u32 [#allocation8], 4
          %s192 = int_to_ptr.vmem [resolvable:$true] %s191
          %197 = dma.hbm_to_vmem [thread:$0]  %s3, 6144, %s192, [#allocation7], 128, 128, 8
        $region24: #{tpu_custom_call.1} parent=11 // pred_fallthru
          _
        // Predicated region
        $region25: #{tpu_custom_call.1} parent=11 // pred_check
          %p198 = pneg %p128
        $region26: #{tpu_custom_call.1} parent=11 // pred_check_branch
          %200 = sbr.rel (%p198) target = $region28
        $region27: #{tpu_custom_call.1} parent=11 // pred_region
          _
        $region28: #{tpu_custom_call.1} parent=11 // pred_fallthru
          _
      $region12: #{tpu_custom_call.1} parent=5 // pred_fallthru
        _
      %p201 = scmp.lt.s32.totalorder %s18, 2
      // Predicated region
      $region29: #{tpu_custom_call.1} parent=5 // pred_check
        %p202 = pneg %p201
      $region30: #{tpu_custom_call.1} parent=5 // pred_check_branch
        %204 = sbr.rel (%p202) target = $region32
      $region31: #{tpu_custom_call.1} parent=5 // pred_region
        // Predicated region
        $region33: #{tpu_custom_call.1} parent=31 // pred_check
          %p205 = pneg %p38
        $region34: #{tpu_custom_call.1} parent=31 // pred_check_branch
          %207 = sbr.rel (%p205) target = $region36
        $region35: #{tpu_custom_call.1} parent=31 // pred_region
          %s208 = sand.u32 %s28, 1
          %s209 = scalar_lea.sflag [#allocation4], %s208
          %s210 = sand.u32 %s28, 1
          %s211 = smul.addr %s210, 16
          %s212 = scalar_lea.vmem [#allocation3], %s211
          %s214 = ssub.s32 256, 256
          %215 = vsyncadd %s209, %s214
          %s216 = smul.addr %s18, 2
          %s217 = smul.addr %s216, 128
          %s218 = scalar_lea.hbm %s0, %s217
          %s219 = sshll.u32 %s212, 4
          %s220 = int_to_ptr.vmem [resolvable:$true] %s219
          %225 = dma.hbm_to_vmem [thread:$0]  %s218, 256, %s220, %s209, 128, 128, 8
        $region36: #{tpu_custom_call.1} parent=31 // pred_fallthru
          _
      $region32: #{tpu_custom_call.1} parent=5 // pred_fallthru
        _
      %p226 = scmp.le.s32.totalorder 1, %s18
      %p227 = scmp.lt.s32.totalorder %s18, 3
      %p228 = pnand %p226, %p227
      %p229 = pneg %p228
      // Predicated region
      $region37: #{tpu_custom_call.1} parent=5 // pred_check
        _
      $region38: #{tpu_custom_call.1} parent=5 // pred_check_branch
        %231 = sbr.rel (%p228) target = $region40
      $region39: #{tpu_custom_call.1} parent=5 // pred_region
        %s232 = ssub.s32 %s18, 1
        %s233 = sand.u32 %s31, 1
        %s234 = scalar_lea.sflag [#allocation4], %s233
        %s235 = sand.u32 %s31, 1
        %s236 = smul.addr %s235, 16
        %s237 = scalar_lea.vmem [#allocation3], %s236
        // Predicated region
        $region41: #{tpu_custom_call.1} parent=39 // pred_check
          %p238 = pneg %p44
        $region42: #{tpu_custom_call.1} parent=39 // pred_check_branch
          %240 = sbr.rel (%p238) target = $region44
        $region43: #{tpu_custom_call.1} parent=39 // pred_region
          %241 = dma.done %s234, 256
        $region44: #{tpu_custom_call.1} parent=39 // pred_fallthru
          _
        // Predicated region
        $region45: #{tpu_custom_call.1} parent=39 // pred_check
          %p242 = pneg %p65
        $region46: #{tpu_custom_call.1} parent=39 // pred_check_branch
          %244 = sbr.rel (%p242) target = $region48
        $region47: #{tpu_custom_call.1} parent=39 // pred_region
          %245 = dma.done [#allocation7], 6144
        $region48: #{tpu_custom_call.1} parent=39 // pred_fallthru
          _
        // Predicated region
        $region49: #{tpu_custom_call.1} parent=39 // pred_check
          %p246 = pneg %p107
        $region50: #{tpu_custom_call.1} parent=39 // pred_check_branch
          %248 = sbr.rel (%p246) target = $region52
        $region51: #{tpu_custom_call.1} parent=39 // pred_region
          %249 = dma.done [#allocation7], 6144
        $region52: #{tpu_custom_call.1} parent=39 // pred_fallthru
          _
        %s250 = sand.u32 %s31, 1
        %s251 = scalar_lea.sflag [#allocation4], %s250
        %s252 = sand.u32 %s31, 1
        %s253 = smul.addr %s252, 16
        %s254 = scalar_lea.vmem [#allocation3], %s253
        %p255 = pneg %p44
        %p256 = pneg %p41
        %p257 = pneg %p65
        %p258 = pneg %p62
        %p259 = pneg %p86
        %p260 = pneg %p83
        %p261 = pneg %p107
        %p262 = pneg %p104
        %p263 = pneg %p128
        %p264 = pneg %p125
        %p265 = pneg %p154
        %p266 = pneg %p151
        %s267 = sand.u32 %s141, 1
        %s268 = scalar_lea.sflag [#allocation5], %s267
        %s269 = sand.u32 %s141, 1
        %s270 = smul.addr %s269, 16
        %s271 = scalar_lea.vmem [#allocation9], %s270
        %272 = vst [vmem:[#allocation2] sm:$0x1] 0.0
        %273 = vst [vmem:[#allocation2 + $0x11] sm:$0x1] 0.0
        %v274 = vld [vmem:[%s237] sm:$0xff]
        %v275 = vld [vmem:[%s237 + $0x8] sm:$0xff]
        %276 = vst [vmem:[#allocation2 + $0x1] sm:$0xff] %v274
        %277 = vst [vmem:[#allocation2 + $0x9] sm:$0xff] %v275
        %v278 = vld [vmem:[#allocation2] sm:$0xff]
        %v279 = vld [vmem:[#allocation2 + $0x8] sm:$0xff]
        %v280 = vld [vmem:[#allocation2 + $0x1] sm:$0xff]
        %v281 = vld [vmem:[#allocation2 + $0x9] sm:$0xff]
        %v282 = vld [vmem:[#allocation2 + $0x2] sm:$0xff]
        %v283 = vld [vmem:[#allocation2 + $0xa] sm:$0xff]
        %v284 = vld [vmem:[#allocation6] sm:$0xff]
        %v285 = vld [vmem:[#allocation6 + $0x8] sm:$0xff]
        %v286 = vld [vmem:[#allocation6 + $0x10] sm:$0xff]
        %v287 = vld [vmem:[#allocation6 + $0x18] sm:$0xff]
        %v288 = vld [vmem:[#allocation6 + $0x20] sm:$0xff]
        %v289 = vld [vmem:[#allocation6 + $0x28] sm:$0xff]
        %v290 = vld [vmem:[#allocation6 + $0x30] sm:$0xff]
        %v291 = vld [vmem:[#allocation6 + $0x38] sm:$0xff]
        %v292 = vld [vmem:[#allocation6 + $0x40] sm:$0xff]
        %v293 = vld [vmem:[#allocation6 + $0x48] sm:$0xff]
        %v294 = vld [vmem:[#allocation6 + $0x50] sm:$0xff]
        %v295 = vld [vmem:[#allocation6 + $0x58] sm:$0xff]
        %v296 = vld [vmem:[#allocation6 + $0x60] sm:$0xff]
        %v297 = vld [vmem:[#allocation6 + $0x68] sm:$0xff]
        %v298 = vld [vmem:[#allocation6 + $0x70] sm:$0xff]
        %v299 = vld [vmem:[#allocation6 + $0x78] sm:$0xff]
        %v300 = vld [vmem:[#allocation6 + $0x80] sm:$0xff]
        %v301 = vld [vmem:[#allocation6 + $0x88] sm:$0xff]
        %v302 = vld [vmem:[#allocation6 + $0x90] sm:$0xff]
        %v303 = vld [vmem:[#allocation6 + $0x98] sm:$0xff]
        %v304 = vld [vmem:[#allocation6 + $0xa0] sm:$0xff]
        %v305 = vld [vmem:[#allocation6 + $0xa8] sm:$0xff]
        %v306 = vld [vmem:[#allocation6 + $0xb0] sm:$0xff]
        %v307 = vld [vmem:[#allocation6 + $0xb8] sm:$0xff]
        %v308 = vld [vmem:[#allocation6 + $0xc0] sm:$0xff]
        %v309 = vld [vmem:[#allocation6 + $0xc8] sm:$0xff]
        %v310 = vld [vmem:[#allocation6 + $0xd0] sm:$0xff]
        %v311 = vld [vmem:[#allocation6 + $0xd8] sm:$0xff]
        %v312 = vld [vmem:[#allocation6 + $0xe0] sm:$0xff]
        %v313 = vld [vmem:[#allocation6 + $0xe8] sm:$0xff]
        %v314 = vld [vmem:[#allocation6 + $0xf0] sm:$0xff]
        %v315 = vld [vmem:[#allocation6 + $0xf8] sm:$0xff]
        %v316 = vld [vmem:[#allocation6 + $0x100] sm:$0xff]
        %v317 = vld [vmem:[#allocation6 + $0x108] sm:$0xff]
        %v318 = vld [vmem:[#allocation6 + $0x110] sm:$0xff]
        %v319 = vld [vmem:[#allocation6 + $0x118] sm:$0xff]
        %v320 = vld [vmem:[#allocation6 + $0x120] sm:$0xff]
        %v321 = vld [vmem:[#allocation6 + $0x128] sm:$0xff]
        %v322 = vld [vmem:[#allocation6 + $0x130] sm:$0xff]
        %v323 = vld [vmem:[#allocation6 + $0x138] sm:$0xff]
        %v324 = vld [vmem:[#allocation6 + $0x140] sm:$0xff]
        %v325 = vld [vmem:[#allocation6 + $0x148] sm:$0xff]
        %v326 = vld [vmem:[#allocation6 + $0x150] sm:$0xff]
        %v327 = vld [vmem:[#allocation6 + $0x158] sm:$0xff]
        %v328 = vld [vmem:[#allocation6 + $0x160] sm:$0xff]
        %v329 = vld [vmem:[#allocation6 + $0x168] sm:$0xff]
        %v330 = vld [vmem:[#allocation6 + $0x170] sm:$0xff]
        %v331 = vld [vmem:[#allocation6 + $0x178] sm:$0xff]
        %v332 = vld [vmem:[%s2] sm:$0x1]
        %v334 = vlaneseq
        %v335 = vshrl.u32 %v334, 7
        %v336 = vsub.s32 0, %v335
        %v337 = vrot.slane %v332, %v336
        %339 = vmatprep.subr.mxu0 0.0
        %340 = vmatpush1.msra.mxu0 %v299
        %341 = vmatprep.subr.mxu0 0.0
        %342 = vmatpush1.msra.mxu0 %v298
        %343 = vmatprep.subr.mxu0 0.0
        %344 = vmatpush1.msra.mxu0 %v297
        %345 = vmatprep.subr.mxu0 0.0
        %346 = vmatpush1.msra.mxu0 %v296
        %347 = vmatprep.subr.mxu0 0.0
        %348 = vmatpush1.msra.mxu0 %v295
        %349 = vmatprep.subr.mxu0 0.0
        %350 = vmatpush1.msra.mxu0 %v294
        %351 = vmatprep.subr.mxu0 0.0
        %352 = vmatpush1.msra.mxu0 %v293
        %353 = vmatprep.subr.mxu0 0.0
        %354 = vmatpush1.msra.mxu0 %v292
        %355 = vmatprep.subr.mxu0 0.0
        %356 = vmatpush1.msra.mxu0 %v291
        %357 = vmatprep.subr.mxu0 0.0
        %358 = vmatpush1.msra.mxu0 %v290
        %359 = vmatprep.subr.mxu0 0.0
        %360 = vmatpush1.msra.mxu0 %v289
        %361 = vmatprep.subr.mxu0 0.0
        %362 = vmatpush1.msra.mxu0 %v288
        %363 = vmatprep.subr.mxu0 0.0
        %364 = vmatpush1.msra.mxu0 %v287
        %365 = vmatprep.subr.mxu0 0.0
        %366 = vmatpush1.msra.mxu0 %v286
        %367 = vmatprep.subr.mxu0 0.0
        %368 = vmatpush1.msra.mxu0 %v285
        %369 = vmatprep.subr.mxu0 0.0
        %370 = vmatpush1.msra.mxu0 %v284
        %371 = vmatprep.subr.mxu0 0.0
        %372 = vmatpush2.msra.mxu0 %v315
        %373 = vmatprep.subr.mxu0 0.0
        %374 = vmatpush2.msra.mxu0 %v314
        %375 = vmatprep.subr.mxu0 0.0
        %376 = vmatpush2.msra.mxu0 %v313
        %377 = vmatprep.subr.mxu0 0.0
        %378 = vmatpush2.msra.mxu0 %v312
        %379 = vmatprep.subr.mxu0 0.0
        %380 = vmatpush2.msra.mxu0 %v311
        %381 = vmatprep.subr.mxu0 0.0
        %382 = vmatpush2.msra.mxu0 %v310
        %383 = vmatprep.subr.mxu0 0.0
        %384 = vmatpush2.msra.mxu0 %v309
        %385 = vmatprep.subr.mxu0 0.0
        %386 = vmatpush2.msra.mxu0 %v308
        %387 = vmatprep.subr.mxu0 0.0
        %388 = vmatpush2.msra.mxu0 %v307
        %389 = vmatprep.subr.mxu0 0.0
        %390 = vmatpush2.msra.mxu0 %v306
        %391 = vmatprep.subr.mxu0 0.0
        %392 = vmatpush2.msra.mxu0 %v305
        %393 = vmatprep.subr.mxu0 0.0
        %394 = vmatpush2.msra.mxu0 %v304
        %395 = vmatprep.subr.mxu0 0.0
        %396 = vmatpush2.msra.mxu0 %v303
        %397 = vmatprep.subr.mxu0 0.0
        %398 = vmatpush2.msra.mxu0 %v302
        %399 = vmatprep.subr.mxu0 0.0
        %400 = vmatpush2.msra.mxu0 %v301
        %401 = vmatprep.subr.mxu0 0.0
        %402 = vmatpush2.msra.mxu0 %v300
        %403 = vmatprep.mubr.f32.mxu0 %v280
        %404 = vmatmul.mubr.f32.gmra.mxu0 %v278
        %v405 = vpop.f32.mrf.mxu0
        %v406 = vadd.f32 %v337, %v405
        %v407 = vpop.f32.mrf.mxu0
        %408 = vmatprep.mubr.f32.mxu0 %v281
        %409 = vmatmul.mubr.f32.gmra.mxu0 %v279
        %v410 = vpop.f32.mrf.mxu0
        %v411 = vadd.f32 %v337, %v410
        %v412 = vpop.f32.mrf.mxu0
        %413 = vdwg.mxu0
        %414 = vmatprep.subr.mxu0 0.0
        %415 = vmatpush1.msra.mxu0 %v331
        %416 = vmatprep.subr.mxu0 0.0
        %417 = vmatpush1.msra.mxu0 %v330
        %418 = vmatprep.subr.mxu0 0.0
        %419 = vmatpush1.msra.mxu0 %v329
        %420 = vmatprep.subr.mxu0 0.0
        %421 = vmatpush1.msra.mxu0 %v328
        %422 = vmatprep.subr.mxu0 0.0
        %423 = vmatpush1.msra.mxu0 %v327
        %424 = vmatprep.subr.mxu0 0.0
        %425 = vmatpush1.msra.mxu0 %v326
        %426 = vmatprep.subr.mxu0 0.0
        %427 = vmatpush1.msra.mxu0 %v325
        %428 = vmatprep.subr.mxu0 0.0
        %429 = vmatpush1.msra.mxu0 %v324
        %430 = vmatprep.subr.mxu0 0.0
        %431 = vmatpush1.msra.mxu0 %v323
        %432 = vmatprep.subr.mxu0 0.0
        %433 = vmatpush1.msra.mxu0 %v322
        %434 = vmatprep.subr.mxu0 0.0
        %435 = vmatpush1.msra.mxu0 %v321
        %436 = vmatprep.subr.mxu0 0.0
        %437 = vmatpush1.msra.mxu0 %v320
        %438 = vmatprep.subr.mxu0 0.0
        %439 = vmatpush1.msra.mxu0 %v319
        %440 = vmatprep.subr.mxu0 0.0
        %441 = vmatpush1.msra.mxu0 %v318
        %442 = vmatprep.subr.mxu0 0.0
        %443 = vmatpush1.msra.mxu0 %v317
        %444 = vmatprep.subr.mxu0 0.0
        %445 = vmatpush1.msra.mxu0 %v316
        %446 = vmatprep.subr.mxu0 0.0
        %447 = vmatpush2.msra.mxu0 0.0
        %448 = vmatprep.subr.mxu0 0.0
        %449 = vmatpush2.msra.mxu0 0.0
        %450 = vmatprep.subr.mxu0 0.0
        %451 = vmatpush2.msra.mxu0 0.0
        %452 = vmatprep.subr.mxu0 0.0
        %453 = vmatpush2.msra.mxu0 0.0
        %454 = vmatprep.subr.mxu0 0.0
        %455 = vmatpush2.msra.mxu0 0.0
        %456 = vmatprep.subr.mxu0 0.0
        %457 = vmatpush2.msra.mxu0 0.0
        %458 = vmatprep.subr.mxu0 0.0
        %459 = vmatpush2.msra.mxu0 0.0
        %460 = vmatprep.subr.mxu0 0.0
        %461 = vmatpush2.msra.mxu0 0.0
        %462 = vmatprep.subr.mxu0 0.0
        %463 = vmatpush2.msra.mxu0 0.0
        %464 = vmatprep.subr.mxu0 0.0
        %465 = vmatpush2.msra.mxu0 0.0
        %466 = vmatprep.subr.mxu0 0.0
        %467 = vmatpush2.msra.mxu0 0.0
        %468 = vmatprep.subr.mxu0 0.0
        %469 = vmatpush2.msra.mxu0 0.0
        %470 = vmatprep.subr.mxu0 0.0
        %471 = vmatpush2.msra.mxu0 0.0
        %472 = vmatprep.subr.mxu0 0.0
        %473 = vmatpush2.msra.mxu0 0.0
        %474 = vmatprep.subr.mxu0 0.0
        %475 = vmatpush2.msra.mxu0 0.0
        %476 = vmatprep.subr.mxu0 0.0
        %477 = vmatpush2.msra.mxu0 0.0
        %478 = vmatprep.mubr.f32.mxu0 0.0
        %479 = vmatmul.mubr.f32.gmra.mxu0 %v282
        %v480 = vpop.f32.mrf.mxu0
        %v481 = vadd.f32 %v406, %v480
        %v482 = vpop.f32.mrf.mxu0
        %483 = vmatprep.mubr.f32.mxu0 0.0
        %484 = vmatmul.mubr.f32.gmra.mxu0 %v283
        %v485 = vpop.f32.mrf.mxu0
        %v486 = vadd.f32 %v411, %v485
        %v487 = vpop.f32.mrf.mxu0
        %488 = vdwg.mxu0
        %v489 = vmax.f32 %v481, 0.0
        %v490 = vmax.f32 %v486, 0.0
        %491 = vst [vmem:[#allocation2 + $0x1] sm:$0xff] %v489
        %492 = vst [vmem:[#allocation2 + $0x9] sm:$0xff] %v490
        %v493 = vld [vmem:[#allocation2] sm:$0xff]
        %v494 = vld [vmem:[#allocation2 + $0x8] sm:$0xff]
        %v495 = vld [vmem:[#allocation2 + $0x1] sm:$0xff]
        %v496 = vld [vmem:[#allocation2 + $0x9] sm:$0xff]
        %v497 = vld [vmem:[#allocation2 + $0x2] sm:$0xff]
        %v498 = vld [vmem:[#allocation2 + $0xa] sm:$0xff]
        %v499 = vld [vmem:[#allocation8] sm:$0xff]
        %v500 = vld [vmem:[#allocation8 + $0x8] sm:$0xff]
        %v501 = vld [vmem:[#allocation8 + $0x10] sm:$0xff]
        %v502 = vld [vmem:[#allocation8 + $0x18] sm:$0xff]
        %v503 = vld [vmem:[#allocation8 + $0x20] sm:$0xff]
        %v504 = vld [vmem:[#allocation8 + $0x28] sm:$0xff]
        %v505 = vld [vmem:[#allocation8 + $0x30] sm:$0xff]
        %v506 = vld [vmem:[#allocation8 + $0x38] sm:$0xff]
        %v507 = vld [vmem:[#allocation8 + $0x40] sm:$0xff]
        %v508 = vld [vmem:[#allocation8 + $0x48] sm:$0xff]
        %v509 = vld [vmem:[#allocation8 + $0x50] sm:$0xff]
        %v510 = vld [vmem:[#allocation8 + $0x58] sm:$0xff]
        %v511 = vld [vmem:[#allocation8 + $0x60] sm:$0xff]
        %v512 = vld [vmem:[#allocation8 + $0x68] sm:$0xff]
        %v513 = vld [vmem:[#allocation8 + $0x70] sm:$0xff]
        %v514 = vld [vmem:[#allocation8 + $0x78] sm:$0xff]
        %v515 = vld [vmem:[#allocation8 + $0x80] sm:$0xff]
        %v516 = vld [vmem:[#allocation8 + $0x88] sm:$0xff]
        %v517 = vld [vmem:[#allocation8 + $0x90] sm:$0xff]
        %v518 = vld [vmem:[#allocation8 + $0x98] sm:$0xff]
        %v519 = vld [vmem:[#allocation8 + $0xa0] sm:$0xff]
        %v520 = vld [vmem:[#allocation8 + $0xa8] sm:$0xff]
        %v521 = vld [vmem:[#allocation8 + $0xb0] sm:$0xff]
        %v522 = vld [vmem:[#allocation8 + $0xb8] sm:$0xff]
        %v523 = vld [vmem:[#allocation8 + $0xc0] sm:$0xff]
        %v524 = vld [vmem:[#allocation8 + $0xc8] sm:$0xff]
        %v525 = vld [vmem:[#allocation8 + $0xd0] sm:$0xff]
        %v526 = vld [vmem:[#allocation8 + $0xd8] sm:$0xff]
        %v527 = vld [vmem:[#allocation8 + $0xe0] sm:$0xff]
        %v528 = vld [vmem:[#allocation8 + $0xe8] sm:$0xff]
        %v529 = vld [vmem:[#allocation8 + $0xf0] sm:$0xff]
        %v530 = vld [vmem:[#allocation8 + $0xf8] sm:$0xff]
        %v531 = vld [vmem:[#allocation8 + $0x100] sm:$0xff]
        %v532 = vld [vmem:[#allocation8 + $0x108] sm:$0xff]
        %v533 = vld [vmem:[#allocation8 + $0x110] sm:$0xff]
        %v534 = vld [vmem:[#allocation8 + $0x118] sm:$0xff]
        %v535 = vld [vmem:[#allocation8 + $0x120] sm:$0xff]
        %v536 = vld [vmem:[#allocation8 + $0x128] sm:$0xff]
        %v537 = vld [vmem:[#allocation8 + $0x130] sm:$0xff]
        %v538 = vld [vmem:[#allocation8 + $0x138] sm:$0xff]
        %v539 = vld [vmem:[#allocation8 + $0x140] sm:$0xff]
        %v540 = vld [vmem:[#allocation8 + $0x148] sm:$0xff]
        %v541 = vld [vmem:[#allocation8 + $0x150] sm:$0xff]
        %v542 = vld [vmem:[#allocation8 + $0x158] sm:$0xff]
        %v543 = vld [vmem:[#allocation8 + $0x160] sm:$0xff]
        %v544 = vld [vmem:[#allocation8 + $0x168] sm:$0xff]
        %v545 = vld [vmem:[#allocation8 + $0x170] sm:$0xff]
        %v546 = vld [vmem:[#allocation8 + $0x178] sm:$0xff]
        %v547 = vld [vmem:[%s4] sm:$0x1]
        %v549 = vlaneseq
        %v550 = vshrl.u32 %v549, 7
        %v551 = vsub.s32 0, %v550
        %v552 = vrot.slane %v547, %v551
        %554 = vmatprep.subr.mxu0 0.0
        %555 = vmatpush1.msra.mxu0 %v514
        %556 = vmatprep.subr.mxu0 0.0
        %557 = vmatpush1.msra.mxu0 %v513
        %558 = vmatprep.subr.mxu0 0.0
        %559 = vmatpush1.msra.mxu0 %v512
        %560 = vmatprep.subr.mxu0 0.0
        %561 = vmatpush1.msra.mxu0 %v511
        %562 = vmatprep.subr.mxu0 0.0
        %563 = vmatpush1.msra.mxu0 %v510
        %564 = vmatprep.subr.mxu0 0.0
        %565 = vmatpush1.msra.mxu0 %v509
        %566 = vmatprep.subr.mxu0 0.0
        %567 = vmatpush1.msra.mxu0 %v508
        %568 = vmatprep.subr.mxu0 0.0
        %569 = vmatpush1.msra.mxu0 %v507
        %570 = vmatprep.subr.mxu0 0.0
        %571 = vmatpush1.msra.mxu0 %v506
        %572 = vmatprep.subr.mxu0 0.0
        %573 = vmatpush1.msra.mxu0 %v505
        %574 = vmatprep.subr.mxu0 0.0
        %575 = vmatpush1.msra.mxu0 %v504
        %576 = vmatprep.subr.mxu0 0.0
        %577 = vmatpush1.msra.mxu0 %v503
        %578 = vmatprep.subr.mxu0 0.0
        %579 = vmatpush1.msra.mxu0 %v502
        %580 = vmatprep.subr.mxu0 0.0
        %581 = vmatpush1.msra.mxu0 %v501
        %582 = vmatprep.subr.mxu0 0.0
        %583 = vmatpush1.msra.mxu0 %v500
        %584 = vmatprep.subr.mxu0 0.0
        %585 = vmatpush1.msra.mxu0 %v499
        %586 = vmatprep.subr.mxu0 0.0
        %587 = vmatpush2.msra.mxu0 %v530
        %588 = vmatprep.subr.mxu0 0.0
        %589 = vmatpush2.msra.mxu0 %v529
        %590 = vmatprep.subr.mxu0 0.0
        %591 = vmatpush2.msra.mxu0 %v528
        %592 = vmatprep.subr.mxu0 0.0
        %593 = vmatpush2.msra.mxu0 %v527
        %594 = vmatprep.subr.mxu0 0.0
        %595 = vmatpush2.msra.mxu0 %v526
        %596 = vmatprep.subr.mxu0 0.0
        %597 = vmatpush2.msra.mxu0 %v525
        %598 = vmatprep.subr.mxu0 0.0
        %599 = vmatpush2.msra.mxu0 %v524
        %600 = vmatprep.subr.mxu0 0.0
        %601 = vmatpush2.msra.mxu0 %v523
        %602 = vmatprep.subr.mxu0 0.0
        %603 = vmatpush2.msra.mxu0 %v522
        %604 = vmatprep.subr.mxu0 0.0
        %605 = vmatpush2.msra.mxu0 %v521
        %606 = vmatprep.subr.mxu0 0.0
        %607 = vmatpush2.msra.mxu0 %v520
        %608 = vmatprep.subr.mxu0 0.0
        %609 = vmatpush2.msra.mxu0 %v519
        %610 = vmatprep.subr.mxu0 0.0
        %611 = vmatpush2.msra.mxu0 %v518
        %612 = vmatprep.subr.mxu0 0.0
        %613 = vmatpush2.msra.mxu0 %v517
        %614 = vmatprep.subr.mxu0 0.0
        %615 = vmatpush2.msra.mxu0 %v516
        %616 = vmatprep.subr.mxu0 0.0
        %617 = vmatpush2.msra.mxu0 %v515
        %618 = vmatprep.mubr.f32.mxu0 %v495
        %619 = vmatmul.mubr.f32.gmra.mxu0 %v493
        %v620 = vpop.f32.mrf.mxu0
        %v621 = vadd.f32 %v552, %v620
        %v622 = vpop.f32.mrf.mxu0
        %623 = vmatprep.mubr.f32.mxu0 %v496
        %624 = vmatmul.mubr.f32.gmra.mxu0 %v494
        %v625 = vpop.f32.mrf.mxu0
        %v626 = vadd.f32 %v552, %v625
        %v627 = vpop.f32.mrf.mxu0
        %628 = vdwg.mxu0
        %629 = vmatprep.subr.mxu0 0.0
        %630 = vmatpush1.msra.mxu0 %v546
        %631 = vmatprep.subr.mxu0 0.0
        %632 = vmatpush1.msra.mxu0 %v545
        %633 = vmatprep.subr.mxu0 0.0
        %634 = vmatpush1.msra.mxu0 %v544
        %635 = vmatprep.subr.mxu0 0.0
        %636 = vmatpush1.msra.mxu0 %v543
        %637 = vmatprep.subr.mxu0 0.0
        %638 = vmatpush1.msra.mxu0 %v542
        %639 = vmatprep.subr.mxu0 0.0
        %640 = vmatpush1.msra.mxu0 %v541
        %641 = vmatprep.subr.mxu0 0.0
        %642 = vmatpush1.msra.mxu0 %v540
        %643 = vmatprep.subr.mxu0 0.0
        %644 = vmatpush1.msra.mxu0 %v539
        %645 = vmatprep.subr.mxu0 0.0
        %646 = vmatpush1.msra.mxu0 %v538
        %647 = vmatprep.subr.mxu0 0.0
        %648 = vmatpush1.msra.mxu0 %v537
        %649 = vmatprep.subr.mxu0 0.0
        %650 = vmatpush1.msra.mxu0 %v536
        %651 = vmatprep.subr.mxu0 0.0
        %652 = vmatpush1.msra.mxu0 %v535
        %653 = vmatprep.subr.mxu0 0.0
        %654 = vmatpush1.msra.mxu0 %v534
        %655 = vmatprep.subr.mxu0 0.0
        %656 = vmatpush1.msra.mxu0 %v533
        %657 = vmatprep.subr.mxu0 0.0
        %658 = vmatpush1.msra.mxu0 %v532
        %659 = vmatprep.subr.mxu0 0.0
        %660 = vmatpush1.msra.mxu0 %v531
        %661 = vmatprep.subr.mxu0 0.0
        %662 = vmatpush2.msra.mxu0 0.0
        %663 = vmatprep.subr.mxu0 0.0
        %664 = vmatpush2.msra.mxu0 0.0
        %665 = vmatprep.subr.mxu0 0.0
        %666 = vmatpush2.msra.mxu0 0.0
        %667 = vmatprep.subr.mxu0 0.0
        %668 = vmatpush2.msra.mxu0 0.0
        %669 = vmatprep.subr.mxu0 0.0
        %670 = vmatpush2.msra.mxu0 0.0
        %671 = vmatprep.subr.mxu0 0.0
        %672 = vmatpush2.msra.mxu0 0.0
        %673 = vmatprep.subr.mxu0 0.0
        %674 = vmatpush2.msra.mxu0 0.0
        %675 = vmatprep.subr.mxu0 0.0
        %676 = vmatpush2.msra.mxu0 0.0
        %677 = vmatprep.subr.mxu0 0.0
        %678 = vmatpush2.msra.mxu0 0.0
        %679 = vmatprep.subr.mxu0 0.0
        %680 = vmatpush2.msra.mxu0 0.0
        %681 = vmatprep.subr.mxu0 0.0
        %682 = vmatpush2.msra.mxu0 0.0
        %683 = vmatprep.subr.mxu0 0.0
        %684 = vmatpush2.msra.mxu0 0.0
        %685 = vmatprep.subr.mxu0 0.0
        %686 = vmatpush2.msra.mxu0 0.0
        %687 = vmatprep.subr.mxu0 0.0
        %688 = vmatpush2.msra.mxu0 0.0
        %689 = vmatprep.subr.mxu0 0.0
        %690 = vmatpush2.msra.mxu0 0.0
        %691 = vmatprep.subr.mxu0 0.0
        %692 = vmatpush2.msra.mxu0 0.0
        %693 = vmatprep.mubr.f32.mxu0 0.0
        %694 = vmatmul.mubr.f32.gmra.mxu0 %v497
        %v695 = vpop.f32.mrf.mxu0
        %v696 = vadd.f32 %v621, %v695
        %v697 = vpop.f32.mrf.mxu0
        %698 = vmatprep.mubr.f32.mxu0 0.0
        %699 = vmatmul.mubr.f32.gmra.mxu0 %v498
        %v700 = vpop.f32.mrf.mxu0
        %v701 = vadd.f32 %v626, %v700
        %v702 = vpop.f32.mrf.mxu0
        %703 = vdwg.mxu0
        %v704 = vadd.f32 %v696, %v274
        %v705 = vadd.f32 %v701, %v275
        %706 = vst [vmem:[%s271] sm:$0xff] %v704
        %707 = vst [vmem:[%s271 + $0x8] sm:$0xff] %v705
        %s708 = sand.u32 %s141, 1
        %s709 = scalar_lea.sflag [#allocation5], %s708
        %s710 = sand.u32 %s141, 1
        %s711 = smul.addr %s710, 16
        %s712 = scalar_lea.vmem [#allocation9], %s711
        // Predicated region
        $region53: #{tpu_custom_call.1} parent=39 // pred_check
          %p713 = pneg %p151
        $region54: #{tpu_custom_call.1} parent=39 // pred_check_branch
          %715 = sbr.rel (%p713) target = $region56
        $region55: #{tpu_custom_call.1} parent=39 // pred_region
          %s717 = ssub.s32 256, 256
          %718 = vsyncadd %s709, %s717
          %s719 = smul.addr %s23, 2
          %s720 = smul.addr %s719, 128
          %s721 = scalar_lea.hbm %s5, %s720
          %s722 = sshll.u32 %s712, 4
          %s723 = int_to_ptr.vmem [resolvable:$true] %s722
          %728 = dma.vmem_to_hbm [thread:$0]  %s723, 256, %s721, %s709, 128, 128, 8
        $region56: #{tpu_custom_call.1} parent=39 // pred_fallthru
          _
      $region40: #{tpu_custom_call.1} parent=5 // pred_fallthru
        _
      %p729 = scmp.le.s32.totalorder 2, %s18
      // Predicated region
      $region57: #{tpu_custom_call.1} parent=5 // pred_check
        %p730 = pneg %p729
      $region58: #{tpu_custom_call.1} parent=5 // pred_check_branch
        %732 = sbr.rel (%p730) target = $region60
      $region59: #{tpu_custom_call.1} parent=5 // pred_region
        %s733 = ssub.s32 %s18, 2
        // Predicated region
        $region61: #{tpu_custom_call.1} parent=59 // pred_check
          %p734 = pneg %p157
        $region62: #{tpu_custom_call.1} parent=59 // pred_check_branch
          %736 = sbr.rel (%p734) target = $region64
        $region63: #{tpu_custom_call.1} parent=59 // pred_region
          %s737 = sand.u32 %s142, 1
          %s738 = scalar_lea.sflag [#allocation5], %s737
          %s739 = sand.u32 %s142, 1
          %s740 = smul.addr %s739, 16
          %s741 = scalar_lea.vmem [#allocation9], %s740
          %742 = dma.done %s738, 256
        $region64: #{tpu_custom_call.1} parent=59 // pred_fallthru
          _
      $region60: #{tpu_custom_call.1} parent=5 // pred_fallthru
        _
    $region6: #{tpu_custom_call.1} parent=1 // loop_footer
      %s22 = sadd.s32 1, %s18
    $region7: #{tpu_custom_call.1} parent=1 // loop_footer_branch
      %17 = sbr.rel target = $region3
    $region8: #{tpu_custom_call.1} parent=1 // loop_exit
      _
    %743 = vsyncpa [#allocation4], 1
    %s744 = scalar_lea.sflag [#allocation4], 1
    %745 = vsyncpa %s744, 1
    %746 = vsyncpa [#allocation7], 1
    %747 = vsyncpa [#allocation5], 1
    %s748 = scalar_lea.sflag [#allocation5], 1
    %749 = vsyncpa %s748, 1

</llo_original>
